<compile_context>
chip_gen: v6e
topology: v6e:2x2x1
jax: 0.10.0
libtpu: 0.0.40
codegen_flags: <defaults>
</compile_context>

<pallas_src>
import jax
import jax.numpy as jnp
from jax.experimental import pallas as pl
from jax.experimental.pallas import tpu as pltpu

LANES = 128
SUBLANES = 8


def _make_dice_partials_kernel(rows, block_rows, chunk, num_blocks, needs_mask):
    """Per-block partial-sum kernel.

    Each grid step reads one (block_rows, 128) tile of p and t and writes a
    (1, 2, 8, 128) f32 output block:
      out[0, 0] <- chunked fold of p * t
      out[0, 1] <- chunked fold of p + t
    The fold is strip-mined over `chunk`-row slices so intermediates stay in a
    handful of vregs regardless of block_rows.
    """
    n_full = block_rows // chunk
    tail = block_rows - n_full * chunk
    assert chunk % SUBLANES == 0 and tail % SUBLANES == 0

    def kernel(p_ref, t_ref, out_ref):
        i = pl.program_id(0)

        def chunk_partials(off, csize, masked):
            pf = p_ref[pl.ds(off, csize), :].astype(jnp.float32)
            tf = t_ref[pl.ds(off, csize), :].astype(jnp.float32)
            if masked:
                # Only executed for the last (possibly partial) block.
                row = jax.lax.broadcasted_iota(jnp.int32, (csize, LANES), 0)
                valid = (i * block_rows + off + row) < rows
                pf = jnp.where(valid, pf, 0.0)
                tf = jnp.where(valid, tf, 0.0)
            pt = (pf * tf).reshape(csize // SUBLANES, SUBLANES, LANES).sum(axis=0)
            s = (pf + tf).reshape(csize // SUBLANES, SUBLANES, LANES).sum(axis=0)
            return pt, s

        def run(masked):
            zeros = jnp.zeros((SUBLANES, LANES), jnp.float32)

            def body(k, carry):
                acc_i, acc_s = carry
                off = pl.multiple_of(k * chunk, chunk)
                pt, s = chunk_partials(off, chunk, masked)
                return acc_i + pt, acc_s + s

            acc_i, acc_s = jax.lax.fori_loop(
                0, n_full, body, (zeros, zeros), unroll=min(8, max(1, n_full))
            )
            if tail:
                pt, s = chunk_partials(n_full * chunk, tail, masked)
                acc_i = acc_i + pt
                acc_s = acc_s + s
            out_ref[0, 0] = acc_i
            out_ref[0, 1] = acc_s

        if needs_mask:
            @pl.when(i < num_blocks - 1)
            def _():
                run(masked=False)

            @pl.when(i == num_blocks - 1)
            def _():
                run(masked=True)
        else:
            run(masked=False)

    return kernel


def dice_loss(predictions, targets, smooth=1.0, block_rows=8192):
    """Pallas implementation of DiceLoss.forward (returns a scalar f32)."""
    p = jnp.ravel(predictions)
    t = jnp.ravel(targets)
    assert p.shape == t.shape, "predictions and targets must have same numel"
    n = p.shape[0]

    # dtype-aware sublane packing: f32 -> 8-row tiles, bf16 -> 16, int8/fp8 -> 32.
    pack = max(max(1, 4 // p.dtype.itemsize), max(1, 4 // t.dtype.itemsize))
    sub_align = SUBLANES * pack
    slab = sub_align * LANES

    # Align to a whole slab so the flat vector reshapes to a lane-dense
    # (rows, 128) view with rows % sub_align == 0.  Pads (and copies) only
    # when numel is not already aligned; zeros are neutral for all sums.
    rem = n % slab
    if rem:
        p = jnp.pad(p, (0, slab - rem))
        t = jnp.pad(t, (0, slab - rem))
    rows = p.shape[0] // LANES
    p2 = p.reshape(rows, LANES)
    t2 = t.reshape(rows, LANES)

    # In-kernel strip-mine chunk (multiple of every sub_align we support).
    chunk = 256

    # Tile sizing: keep block_rows a multiple of the chunk, clamp to the array.
    block_rows = max(chunk, (int(block_rows) // chunk) * chunk)
    if block_rows > rows:
        block_rows = rows                  # rows is a multiple of sub_align
    chunk = min(chunk, block_rows)
    num_blocks = pl.cdiv(rows, block_rows)

    # v7x megacore: prefer an even grid so both TensorCores stream half each.
    if num_blocks > 1 and num_blocks % 2:
        cand = pl.cdiv(rows, num_blocks + 1)
        cand = max(chunk, -(-cand // chunk) * chunk)
        if pl.cdiv(rows, cand) % 2 == 0:
            block_rows = cand
            num_blocks = pl.cdiv(rows, cand)

    needs_mask = (rows % block_rows) != 0

    # Explicit VMEM budget: 2 inputs x 2 pipeline buffers + headroom for the
    # chunk temporaries / output blocks.  ~24 MiB at f32 block_rows=8192 —
    # above v5e's 16 MiB default scoped limit, well under v7x's 64 MiB.
    in_tile_bytes = block_rows * LANES * (p2.dtype.itemsize + t2.dtype.itemsize)
    vmem_limit = min(2 * in_tile_bytes + (8 << 20), 56 << 20)

    cost = pl.CostEstimate(
        flops=3 * rows * LANES,
        transcendentals=0,
        bytes_accessed=rows * LANES * (p2.dtype.itemsize + t2.dtype.itemsize)
        + num_blocks * 2 * SUBLANES * LANES * 4,
    )

    kernel = _make_dice_partials_kernel(rows, block_rows, chunk, num_blocks, needs_mask)

    partials = pl.pallas_call(
        kernel,
        out_shape=jax.ShapeDtypeStruct((num_blocks, 2, SUBLANES, LANES), jnp.float32),
        grid_spec=pltpu.PrefetchScalarGridSpec(
            num_scalar_prefetch=0,
            grid=(num_blocks,),
            in_specs=[
                pl.BlockSpec((block_rows, LANES), lambda i: (i, 0)),
                pl.BlockSpec((block_rows, LANES), lambda i: (i, 0)),
            ],
            out_specs=pl.BlockSpec((1, 2, SUBLANES, LANES), lambda i: (i, 0, 0, 0)),
        ),
        compiler_params=pltpu.CompilerParams(
            # Each block writes its own output slice (no carried accumulator),
            # so the grid axis is truly parallel -> shardable across the two
            # TensorCores on v7x.
            dimension_semantics=("parallel",),
            vmem_limit_bytes=vmem_limit,
        ),
        cost_estimate=cost,
    )(p2, t2)

    # Tiny finish in plain JAX: (num_blocks, 2, 8, 128) f32 partials -> 2 scalars.
    intersection = jnp.sum(partials[:, 0])
    total = jnp.sum(partials[:, 1])
    dice = (2.0 * intersection + smooth) / (total + smooth)
    return (1.0 - dice).astype(jnp.float32)


def dice_loss_ref(predictions, targets, smooth=1.0):
    p = jnp.ravel(predictions).astype(jnp.float32)
    t = jnp.ravel(targets).astype(jnp.float32)
    inter = jnp.sum(p * t)
    total = jnp.sum(p) + jnp.sum(t)
    return 1.0 - (2.0 * inter + smooth) / (total + smooth)


if __name__ == "__main__":
    key = jax.random.PRNGKey(0)
    kp, kt = jax.random.split(key)
    # NCHW-like segmentation shapes: batch=2, channels=4, spatial=16x16
    preds = jax.nn.sigmoid(jax.random.normal(kp, (2, 4, 16, 16), jnp.float32))
    targs = (jax.random.uniform(kt, (2, 4, 16, 16)) > 0.5).astype(jnp.float32)

    out = dice_loss(preds, targs, smooth=1.0)
    out = jax.block_until_ready(out)

    ref = dice_loss_ref(preds, targs, smooth=1.0)
    assert jnp.allclose(out, ref, atol=1e-5, rtol=1e-5), (out, ref)
    print("KERNEL_OK")
</pallas_src>

<mosaic_0001>
module attributes {stable_mosaic.version = 11 : i64} {
  func.func @kernel(%arg0: i32, %arg1: memref<16x128xf32, #tpu.memory_space<vmem>>, %arg2: memref<16x128xf32, #tpu.memory_space<vmem>>, %arg3: memref<1x2x8x128xf32, #tpu.memory_space<vmem>>) attributes {dimension_semantics = [#tpu.dimension_semantics<parallel>], iteration_bounds = array<i64: 1>, scalar_prefetch = 0 : i64, scratch_operands = 0 : i64, tpu.core_type = #tpu.core_type<tc>, window_params = [{transform_indices = @transform_0, window_bounds = array<i64: 16, 128>}, {transform_indices = @transform_1, window_bounds = array<i64: 16, 128>}, {transform_indices = @transform_2, window_bounds = array<i64: 1, 2, 8, 128>}]} {
    %cst = arith.constant 0.000000e+00 : f32
    %0 = vector.broadcast %cst : f32 to vector<8x128xf32>
    %c0_i32 = arith.constant 0 : i32
    %c16_i32 = arith.constant 16 : i32
    %1 = arith.muli %c0_i32, %c16_i32 : i32
    %2 = tpu.assume_multiple %1, 16 : i32
    %3 = arith.index_cast %2 : i32 to index
    %c0 = arith.constant 0 : index
    %4 = vector.load %arg1[%3, %c0] : memref<16x128xf32, #tpu.memory_space<vmem>>, vector<16x128xf32>
    %5 = arith.index_cast %2 : i32 to index
    %c0_0 = arith.constant 0 : index
    %6 = vector.load %arg2[%5, %c0_0] : memref<16x128xf32, #tpu.memory_space<vmem>>, vector<16x128xf32>
    %7 = arith.mulf %4, %6 : vector<16x128xf32>
    %8 = vector.shape_cast %7 : vector<16x128xf32> to vector<2x8x128xf32>
    %cst_1 = arith.constant dense<0.000000e+00> : vector<8x128xf32>
    %9 = vector.multi_reduction <add>, %8, %cst_1 [0] : vector<2x8x128xf32> to vector<8x128xf32>
    %10 = arith.addf %4, %6 : vector<16x128xf32>
    %11 = vector.shape_cast %10 : vector<16x128xf32> to vector<2x8x128xf32>
    %cst_2 = arith.constant dense<0.000000e+00> : vector<8x128xf32>
    %12 = vector.multi_reduction <add>, %11, %cst_2 [0] : vector<2x8x128xf32> to vector<8x128xf32>
    %13 = arith.addf %0, %9 : vector<8x128xf32>
    %14 = arith.addf %0, %12 : vector<8x128xf32>
    %c1_i32 = arith.constant 1 : i32
    %c0_3 = arith.constant 0 : index
    %c0_4 = arith.constant 0 : index
    %c0_5 = arith.constant 0 : index
    %c0_6 = arith.constant 0 : index
    %15 = vector.load %arg3[%c0_3, %c0_4, %c0_5, %c0_6] : memref<1x2x8x128xf32, #tpu.memory_space<vmem>>, vector<1x1x8x128xf32>
    %16 = vector.shape_cast %15 : vector<1x1x8x128xf32> to vector<8x128xf32>
    %17 = vector.shape_cast %13 : vector<8x128xf32> to vector<1x1x8x128xf32>
    tpu.vector_store %arg3[%c0_3, %c0_4, %c0_5, %c0_6], %17 {strides = array<i32>} : memref<1x2x8x128xf32, #tpu.memory_space<vmem>>, vector<1x1x8x128xf32>,
    %c0_7 = arith.constant 0 : index
    %c1 = arith.constant 1 : index
    %c0_8 = arith.constant 0 : index
    %c0_9 = arith.constant 0 : index
    %18 = vector.load %arg3[%c0_7, %c1, %c0_8, %c0_9] : memref<1x2x8x128xf32, #tpu.memory_space<vmem>>, vector<1x1x8x128xf32>
    %19 = vector.shape_cast %18 : vector<1x1x8x128xf32> to vector<8x128xf32>
    %20 = vector.shape_cast %14 : vector<8x128xf32> to vector<1x1x8x128xf32>
    tpu.vector_store %arg3[%c0_7, %c1, %c0_8, %c0_9], %20 {strides = array<i32>} : memref<1x2x8x128xf32, #tpu.memory_space<vmem>>, vector<1x1x8x128xf32>,
    return
  }
  func.func @transform_0(%arg0: i32) -> (i32, i32) {
    %c0_i32 = arith.constant 0 : i32
    %c0_i32_0 = arith.constant 0 : i32
    return %arg0, %c0_i32 : i32, i32
  }
  func.func @transform_1(%arg0: i32) -> (i32, i32) {
    %c0_i32 = arith.constant 0 : i32
    %c0_i32_0 = arith.constant 0 : i32
    return %arg0, %c0_i32 : i32, i32
  }
  func.func @transform_2(%arg0: i32) -> (i32, i32, i32, i32) {
    %c0_i32 = arith.constant 0 : i32
    %c0_i32_0 = arith.constant 0 : i32
    %c0_i32_1 = arith.constant 0 : i32
    %c0_i32_2 = arith.constant 0 : i32
    return %arg0, %c0_i32, %c0_i32_0, %c0_i32_1 : i32, i32, i32, i32
  }
}

</mosaic_0001>

<llo_original>
// kernel: tpu_custom_call.1
$region0: #{tpu_custom_call.1}
  #allocation0 [shape = 'u32[]', space=smem, size = 0x4, offset = 0x4, fixed_abs, tag = 'smem constant byte address 0x4 - core index']
  #allocation1 [shape = 'u32[144,128]{1,0:T(1,128)}', space=vmem, size = 0x12000, scoped, tag = 'internal scratch']
  %s0 = inlined_call_operand.hbm [shape: f32[16,128], index: 0, kind: input, shape index: {}]
  %s1 = inlined_call_operand.hbm [shape: f32[16,128], index: 1, kind: input, shape index: {}]
  %s2 = inlined_call_operand.hbm [shape: f32[1,2,8,128], index: 2, kind: output, shape index: {}]
  %s3 = sld [smem:[#allocation0]]
  $region26: #{tpu_custom_call.1} parent=0
    _
  %s5 = ssub.s32 1, %s3
  %s6 = scalar_select 0, %s5, %s3
  $region1: #{tpu_custom_call.1} parent=0
    #allocation2 [shape = 'u8[8192]{0}', space=vmem, size = 0x2000, scoped, tag = 'input window, operand 0, single buffered']
    #allocation3 [shape = 's32[1]{0}', space=sflag, size = 0x4, scoped, tag = 'scoped memory for tpu_custom_call.1']
    #allocation4 [shape = 's32[1]{0}', space=sflag, size = 0x4, scoped, tag = 'scoped memory for tpu_custom_call.1']
    #allocation5 [shape = 'u8[8192]{0}', space=vmem, size = 0x2000, scoped, tag = 'input window, operand 1, single buffered']
    #allocation6 [shape = 's32[1]{0}', space=sflag, size = 0x4, scoped, tag = 'scoped memory for tpu_custom_call.1']
    #allocation7 [shape = 'u8[8192]{0}', space=vmem, size = 0x2000, scoped, tag = 'output window, operand 0, single buffered']
    %7 = vsyncpa [#allocation3], 0
    %8 = vsyncpa [#allocation6], 0
    %9 = vsyncpa [#allocation4], 0
    // Predicated region
    $region2: #{tpu_custom_call.1} parent=1 // pred_check
      _
    $region3: #{tpu_custom_call.1} parent=1 // pred_check_branch
      %11 = sbr.rel (0) target = $region5
    $region4: #{tpu_custom_call.1} parent=1 // pred_region
      %s13 = ssub.s32 256, 256
      %14 = vsyncadd [#allocation3], %s13
      %s15 = sshll.u32 [#allocation2], 4
      %s16 = int_to_ptr.vmem [resolvable:$true] %s15
      %21 = dma.hbm_to_vmem [thread:$0]  %s0, 256, %s16, [#allocation3], 128, 128, 8
    $region5: #{tpu_custom_call.1} parent=1 // pred_fallthru
      _
    // Predicated region
    $region6: #{tpu_custom_call.1} parent=1 // pred_check
      _
    $region7: #{tpu_custom_call.1} parent=1 // pred_check_branch
      %23 = sbr.rel (0) target = $region9
    $region8: #{tpu_custom_call.1} parent=1 // pred_region
      %s25 = ssub.s32 256, 256
      %26 = vsyncadd [#allocation6], %s25
      %s27 = sshll.u32 [#allocation5], 4
      %s28 = int_to_ptr.vmem [resolvable:$true] %s27
      %33 = dma.hbm_to_vmem [thread:$0]  %s1, 256, %s28, [#allocation6], 128, 128, 8
    $region9: #{tpu_custom_call.1} parent=1 // pred_fallthru
      _
    // Predicated region
    $region10: #{tpu_custom_call.1} parent=1 // pred_check
      _
    $region11: #{tpu_custom_call.1} parent=1 // pred_check_branch
      %35 = sbr.rel (0) target = $region13
    $region12: #{tpu_custom_call.1} parent=1 // pred_region
      %36 = dma.done [#allocation3], 256
    $region13: #{tpu_custom_call.1} parent=1 // pred_fallthru
      _
    // Predicated region
    $region14: #{tpu_custom_call.1} parent=1 // pred_check
      _
    $region15: #{tpu_custom_call.1} parent=1 // pred_check_branch
      %38 = sbr.rel (0) target = $region17
    $region16: #{tpu_custom_call.1} parent=1 // pred_region
      %39 = dma.done [#allocation6], 256
    $region17: #{tpu_custom_call.1} parent=1 // pred_fallthru
      _
    %v40 = vld [vmem:[#allocation2] sm:$0xff]
    %v41 = vld [vmem:[#allocation2 + $0x8] sm:$0xff]
    %v42 = vld [vmem:[#allocation5] sm:$0xff]
    %v43 = vld [vmem:[#allocation5 + $0x8] sm:$0xff]
    %v44 = vmul.f32 %v40, %v42
    %v45 = vmul.f32 %v41, %v43
    %v46 = vadd.f32 %v44, %v45
    %v47 = vadd.f32 %v40, %v42
    %v48 = vadd.f32 %v41, %v43
    %v49 = vadd.f32 %v47, %v48
    %v50 = vadd.f32 %v46, 0.0
    %v51 = vadd.f32 %v49, 0.0
    %52 = vst [vmem:[#allocation7] sm:$0xff] %v50
    %s53 = scalar_lea.vmem [#allocation7], 8
    %54 = vst [vmem:[%s53] sm:$0xff] %v51
    // Predicated region
    $region18: #{tpu_custom_call.1} parent=1 // pred_check
      _
    $region19: #{tpu_custom_call.1} parent=1 // pred_check_branch
      %56 = sbr.rel (0) target = $region21
    $region20: #{tpu_custom_call.1} parent=1 // pred_region
      %s58 = ssub.s32 256, 256
      %59 = vsyncadd [#allocation4], %s58
      %s60 = sshll.u32 [#allocation7], 4
      %s61 = int_to_ptr.vmem [resolvable:$true] %s60
      %66 = dma.vmem_to_hbm [thread:$0]  %s61, 256, %s2, [#allocation4], 128, 128, 8
    $region21: #{tpu_custom_call.1} parent=1 // pred_fallthru
      _
    // Predicated region
    $region22: #{tpu_custom_call.1} parent=1 // pred_check
      _
    $region23: #{tpu_custom_call.1} parent=1 // pred_check_branch
      %68 = sbr.rel (0) target = $region25
    $region24: #{tpu_custom_call.1} parent=1 // pred_region
      %69 = dma.done [#allocation4], 256
    $region25: #{tpu_custom_call.1} parent=1 // pred_fallthru
      _
    %70 = vsyncpa [#allocation3], 1
    %71 = vsyncpa [#allocation6], 1
    %72 = vsyncpa [#allocation4], 1

</llo_original>
